<compile_context>
chip_gen: v7x
topology: tpu7x:2x2x1
jax: 0.10.0
libtpu: 0.0.40
codegen_flags: <defaults>
</compile_context>

<pallas_src>
import functools

import jax
import jax.numpy as jnp
from jax.experimental import pallas as pl
from jax.experimental.pallas import tpu as pltpu


def _round_up(x, m):
    return ((x + m - 1) // m) * m


# ---------------------------------------------------------------------------
# Kernels
# ---------------------------------------------------------------------------

def _conf_accum_kernel(pred_ref, tgt_ref, out_ref, *, n_cats, n_valid,
                       tile_n, tiles_per_split, mask_tail):
    """Accumulate a partial soft confusion matrix for one (C, TILE_N) tile."""
    p = pl.program_id(0)
    i = pl.program_id(1)

    @pl.when(i == 0)
    def _init():
        out_ref[...] = jnp.zeros_like(out_ref)

    pred = pred_ref[...]                               # (C, T), input dtype
    tgt = tgt_ref[...].astype(jnp.float32)             # (1, T); -1 == masked

    t = pred.shape[1]
    if mask_tail:
        # Zero out-of-range tail columns so garbage (possibly NaN) data past N
        # cannot contaminate the accumulation.
        start = (p * tiles_per_split + i) * tile_n
        col_idx = jax.lax.broadcasted_iota(jnp.int32, (1, t), 1) + start
        pred = jnp.where(col_idx < n_valid, pred, 0)

    if n_cats <= 8:
        # Pure-VPU path: C masked row-sums, fully hidden under the tile DMA.
        cols = []
        for c in range(n_cats):
            sel = (tgt == jnp.float32(c)).astype(pred.dtype)      # (1, T)
            cols.append(jnp.sum((pred * sel).astype(jnp.float32),
                                axis=1, keepdims=True))           # (C, 1)
        conf = jnp.concatenate(cols, axis=1).T                    # (C, C)
    else:
        cls_iota = jax.lax.broadcasted_iota(jnp.float32, (n_cats, t), 0)
        onehot = (cls_iota == tgt).astype(pred.dtype)             # (C, T)
        # conf[i, j] = sum_n onehot[i, n] * pred[j, n]; contract the lane axis
        # of both operands (q @ k.T form) -> small (C, C) MXU matmul.
        conf = jax.lax.dot_general(
            onehot, pred,
            dimension_numbers=(((1,), (1,)), ((), ())),
            preferred_element_type=jnp.float32)

    out_ref[...] += conf[None, :, :].astype(jnp.float32)


def _qwk_epilogue_kernel(partials_ref, loss_ref, conf_ref, *, n_cats, epsilon):
    """Reduce split partials, normalize, and emit the scalar -QWK (runs once)."""
    conf_raw = jnp.sum(partials_ref[...].astype(jnp.float32), axis=0)  # (C, C)
    conf_ref[...] = conf_raw

    total = jnp.sum(conf_raw)
    conf = conf_raw / (total + epsilon)

    ii = jax.lax.broadcasted_iota(jnp.float32, (n_cats, n_cats), 0)
    jj = jax.lax.broadcasted_iota(jnp.float32, (n_cats, n_cats), 1)
    denom = float((n_cats - 1) ** 2) if n_cats > 1 else 1.0
    one_minus_w = 1.0 - (ii - jj) ** 2 / denom

    po = jnp.sum(conf * one_minus_w)
    row = jnp.sum(conf, axis=1, keepdims=True)          # (C, 1)
    col = jnp.sum(conf, axis=0, keepdims=True)          # (1, C)
    pe = jnp.sum(row * col * one_minus_w)

    qwk = (po - pe) / (1.0 - pe + epsilon)
    loss_ref[0, 0] = -qwk


# ---------------------------------------------------------------------------
# Sizing heuristics (per-generation VMEM / core-count aware)
# ---------------------------------------------------------------------------

def _default_num_splits():
    """Best-effort TensorCore count per chip (falls back to 1 on v5e/v6e)."""
    try:
        n = int(getattr(jax.devices()[0], "num_cores", 0) or 0)
        if n >= 1:
            return min(n, 8)
    except Exception:
        pass
    return 1


def _vmem_limit_bytes():
    """~48 MiB on v7x (64 MiB/TC), up to 96 MiB on v5e/v6e (128 MiB)."""
    cap = 0
    try:
        cap = int(pltpu.get_tpu_info().vmem_capacity_bytes)
    except Exception:
        cap = 0
    if cap <= 0:
        cap = 64 * 1024 * 1024          # conservative fallback: v7x per-TC VMEM
    return min((cap * 3) // 4, 96 * 1024 * 1024)


def _auto_tile_n(n, n_cats, pred_itemsize, tgt_itemsize, num_splits, vmem_limit):
    """Largest lane tile that keeps double-buffered streams inside VMEM."""
    c_sub = _round_up(max(n_cats, 8), 8)
    per_col = (2 * c_sub * pred_itemsize      # double-buffered (C, T) pred tiles
               + 2 * 8 * tgt_itemsize         # double-buffered (1, T) target row
               + 4 * c_sub * 4)               # one-hot / iota / f32 temporaries
    budget = (vmem_limit * 2) // 3            # headroom for compiler scratch
    tile = budget // per_col
    tile = min(tile, 128 * 1024)              # diminishing returns past ~128K cols
    tile = min(tile, _round_up(max(pl.cdiv(n, num_splits), 1), 128))
    return int(max((tile // 128) * 128, 128))


# ---------------------------------------------------------------------------
# Forward driver (Pallas calls)
# ---------------------------------------------------------------------------

def _qwk_forward(pred2d, tgt_f, epsilon, tile_n, num_splits):
    """Returns (scalar loss, unnormalized (C, C) confusion matrix)."""
    n, n_cats = pred2d.shape

    if num_splits is None:
        num_splits = _default_num_splits()
    num_splits = max(int(num_splits), 1)

    vmem_limit = _vmem_limit_bytes()
    tgt_dtype = jnp.bfloat16 if n_cats <= 256 else jnp.float32
    tgt_itemsize = jnp.dtype(tgt_dtype).itemsize
    pred_itemsize = jnp.dtype(pred2d.dtype).itemsize

    if tile_n is None:
        tile_n = _auto_tile_n(n, n_cats, pred_itemsize, tgt_itemsize,
                              num_splits, vmem_limit)
    tile_n = max((int(tile_n) // 128) * 128, 128)

    total_blocks = max(pl.cdiv(n, tile_n), 1)
    tiles_per_split = max(pl.cdiv(total_blocks, num_splits), 1)
    covered = num_splits * tiles_per_split * tile_n
    mask_tail = covered != n

    # Lane-dense layout: N on the fast (lane) axis.  Single transpose copy; no
    # padding of either operand -- the tail is masked in-kernel.
    pred_t = pred2d.T                                   # (C, N)
    tgt_row = tgt_f.reshape(1, n).astype(tgt_dtype)     # (1, N); -1 == masked

    col_map = lambda p, i: (0, p * tiles_per_split + i)

    partials = pl.pallas_call(
        functools.partial(_conf_accum_kernel, n_cats=n_cats, n_valid=n,
                          tile_n=tile_n, tiles_per_split=tiles_per_split,
                          mask_tail=mask_tail),
        out_shape=jax.ShapeDtypeStruct((num_splits, n_cats, n_cats),
                                       jnp.float32),
        grid=(num_splits, tiles_per_split),
        in_specs=[
            pl.BlockSpec((n_cats, tile_n), col_map),
            pl.BlockSpec((1, tile_n), col_map),
        ],
        out_specs=pl.BlockSpec((1, n_cats, n_cats), lambda p, i: (p, 0, 0)),
        compiler_params=pltpu.CompilerParams(
            dimension_semantics=("parallel", "arbitrary"),
            vmem_limit_bytes=int(vmem_limit),
        ),
        cost_estimate=pl.CostEstimate(
            flops=2 * n * n_cats * n_cats,
            transcendentals=0,
            bytes_accessed=(n * n_cats * pred_itemsize
                            + n * tgt_itemsize
                            + num_splits * n_cats * n_cats * 4),
        ),
    )(pred_t, tgt_row)

    loss, conf_raw = pl.pallas_call(
        functools.partial(_qwk_epilogue_kernel, n_cats=n_cats,
                          epsilon=float(epsilon)),
        out_shape=(jax.ShapeDtypeStruct((1, 1), jnp.float32),
                   jax.ShapeDtypeStruct((n_cats, n_cats), jnp.float32)),
        in_specs=[pl.BlockSpec(memory_space=pltpu.MemorySpace.VMEM)],
        out_specs=(pl.BlockSpec(memory_space=pltpu.MemorySpace.SMEM),
                   pl.BlockSpec(memory_space=pltpu.MemorySpace.VMEM)),
    )(partials)

    return loss[0, 0], conf_raw


# ---------------------------------------------------------------------------
# Custom VJP (pallas_call has no autodiff rule)
# ---------------------------------------------------------------------------

def _qwk_scalar_from_conf(conf_raw, epsilon):
    """Pure-JAX epilogue math, used only to derive the backward pass."""
    n_cats = conf_raw.shape[0]
    total = jnp.sum(conf_raw)
    conf = conf_raw / (total + epsilon)
    idx = jnp.arange(n_cats, dtype=jnp.float32)
    denom = float((n_cats - 1) ** 2) if n_cats > 1 else 1.0
    one_minus_w = 1.0 - (idx[:, None] - idx[None, :]) ** 2 / denom
    po = jnp.sum(conf * one_minus_w)
    row = jnp.sum(conf, axis=1)
    col = jnp.sum(conf, axis=0)
    pe = jnp.sum(jnp.outer(row, col) * one_minus_w)
    return -(po - pe) / (1.0 - pe + epsilon)


@functools.partial(jax.custom_vjp, nondiff_argnums=(2, 3, 4))
def _neg_qwk(pred2d, tgt_f, epsilon, tile_n, num_splits):
    loss, _ = _qwk_forward(pred2d, tgt_f, epsilon, tile_n, num_splits)
    return loss


def _neg_qwk_fwd(pred2d, tgt_f, epsilon, tile_n, num_splits):
    loss, conf_raw = _qwk_forward(pred2d, tgt_f, epsilon, tile_n, num_splits)
    dtype_token = jnp.zeros((0,), pred2d.dtype)
    return loss, (conf_raw, tgt_f, dtype_token)


def _neg_qwk_bwd(epsilon, tile_n, num_splits, res, g):
    conf_raw, tgt_f, dtype_token = res
    _, pull = jax.vjp(lambda c: _qwk_scalar_from_conf(c, epsilon), conf_raw)
    (dconf,) = pull(jnp.asarray(g, dtype=conf_raw.dtype))
    tgt_i = tgt_f.astype(jnp.int32)                     # -1 for masked rows
    valid = (tgt_i >= 0)[:, None]
    # dL/dpred[n, :] = dL/dconf_raw[tgt[n], :] for valid rows, 0 otherwise.
    dpred = jnp.where(valid, dconf[jnp.clip(tgt_i, 0), :], 0.0)
    return dpred.astype(dtype_token.dtype), jnp.zeros_like(tgt_f)


_neg_qwk.defvjp(_neg_qwk_fwd, _neg_qwk_bwd)


# ---------------------------------------------------------------------------
# Public API
# ---------------------------------------------------------------------------

def qwk_loss_pallas(pred_probs, targets, mask=None, *, epsilon=1e-7,
                    tile_n=None, num_splits=None):
    """Differentiable QWK loss (= -QWK), matching DifferentiableQWKLoss.forward.

    pred_probs: (batch, seq, n_cats) float probabilities (f32 or bf16).
    targets:    (batch, seq) integer categories.
    mask:       optional (batch, seq); treated as boolean (row drop), like the
                PyTorch reference.
    tile_n:     override the auto (VMEM-budget-derived) lane tile size.
    num_splits: override the megacore split count (defaults to cores/chip).
    """
    b, s, n_cats = pred_probs.shape
    n = b * s
    pred2d = pred_probs.reshape(n, n_cats)
    # Targets carried as float32 (-1 == masked) so the custom-VJP boundary only
    # sees float operands; they are narrowed to bf16 for the kernel stream.
    tgt_f = targets.reshape(n).astype(jnp.float32)
    if mask is not None:
        tgt_f = jnp.where(mask.reshape(n) != 0, tgt_f, -1.0)
    return _neg_qwk(pred2d, tgt_f, float(epsilon),
                    None if tile_n is None else int(tile_n),
                    None if num_splits is None else int(num_splits))


def qwk_loss_ref(pred_probs, targets, mask=None, *, epsilon=1e-7):
    """Pure-JAX reference mirroring the PyTorch module."""
    b, s, n_cats = pred_probs.shape
    pred_flat = pred_probs.reshape(-1, n_cats).astype(jnp.float32)
    onehot = jax.nn.one_hot(targets.reshape(-1), n_cats, dtype=jnp.float32)
    if mask is not None:
        onehot = onehot * mask.reshape(-1, 1).astype(jnp.float32)
    conf = onehot.T @ pred_flat
    conf = conf / (conf.sum() + epsilon)
    idx = jnp.arange(n_cats, dtype=jnp.float32)
    denom = float((n_cats - 1) ** 2) if n_cats > 1 else 1.0
    w = (idx[:, None] - idx[None, :]) ** 2 / denom
    po = jnp.sum(conf * (1.0 - w))
    row = conf.sum(axis=1)
    col = conf.sum(axis=0)
    pe = jnp.sum(jnp.outer(row, col) * (1.0 - w))
    qwk = (po - pe) / (1.0 - pe + epsilon)
    return -qwk


if __name__ == "__main__":
    key = jax.random.PRNGKey(0)
    batch, seq, n_cats = 2, 8, 4

    k1, k2, k3 = jax.random.split(key, 3)
    logits = jax.random.normal(k1, (batch, seq, n_cats), dtype=jnp.float32)
    pred_probs = jax.nn.softmax(logits, axis=-1)
    targets = jax.random.randint(k2, (batch, seq), 0, n_cats, dtype=jnp.int32)
    mask = (jax.random.uniform(k3, (batch, seq)) > 0.2).astype(jnp.float32)

    # Masked path.
    loss = jax.block_until_ready(qwk_loss_pallas(pred_probs, targets, mask))
    ref = qwk_loss_ref(pred_probs, targets, mask)
    assert jnp.allclose(loss, ref, atol=1e-5, rtol=1e-4), (loss, ref)

    # No-mask path.
    loss_nm = jax.block_until_ready(qwk_loss_pallas(pred_probs, targets))
    ref_nm = qwk_loss_ref(pred_probs, targets)
    assert jnp.allclose(loss_nm, ref_nm, atol=1e-5, rtol=1e-4), (loss_nm, ref_nm)

    # Multi-tile + 2-way split: exercises tail masking (N=1000 not a multiple
    # of 128), accumulation across the "arbitrary" axis, and the fused
    # cross-split reduction in the epilogue.
    kb1, kb2, kb3 = jax.random.split(jax.random.PRNGKey(1), 3)
    pp2 = jax.nn.softmax(
        jax.random.normal(kb1, (4, 250, n_cats), dtype=jnp.float32), axis=-1)
    tg2 = jax.random.randint(kb2, (4, 250), 0, n_cats, dtype=jnp.int32)
    mk2 = (jax.random.uniform(kb3, (4, 250)) > 0.3).astype(jnp.float32)
    l2 = jax.block_until_ready(
        qwk_loss_pallas(pp2, tg2, mk2, tile_n=128, num_splits=2))
    r2 = qwk_loss_ref(pp2, tg2, mk2)
    assert jnp.allclose(l2, r2, atol=1e-5, rtol=1e-4), (l2, r2)

    # MXU (dot_general) path for larger n_cats.
    kc1, kc2 = jax.random.split(jax.random.PRNGKey(2), 2)
    pp3 = jax.nn.softmax(
        jax.random.normal(kc1, (2, 64, 16), dtype=jnp.float32), axis=-1)
    tg3 = jax.random.randint(kc2, (2, 64), 0, 16, dtype=jnp.int32)
    l3 = jax.block_until_ready(qwk_loss_pallas(pp3, tg3))
    r3 = qwk_loss_ref(pp3, tg3)
    assert jnp.allclose(l3, r3, atol=1e-5, rtol=1e-4), (l3, r3)

    # bf16 pred path (consumed natively in-kernel, f32 accumulation).
    l4 = jax.block_until_ready(
        qwk_loss_pallas(pred_probs.astype(jnp.bfloat16), targets, mask))
    r4 = qwk_loss_ref(pred_probs.astype(jnp.bfloat16), targets, mask)
    assert jnp.allclose(l4, r4, atol=2e-2, rtol=2e-2), (l4, r4)

    # Gradients via the custom VJP vs autodiff of the pure-JAX reference.
    g_pallas = jax.grad(lambda p: qwk_loss_pallas(p, targets, mask))(pred_probs)
    g_ref = jax.grad(lambda p: qwk_loss_ref(p, targets, mask))(pred_probs)
    g_pallas, g_ref = jax.block_until_ready((g_pallas, g_ref))
    assert jnp.allclose(g_pallas, g_ref, atol=1e-5, rtol=1e-4), (g_pallas, g_ref)

    print("KERNEL_OK")
</pallas_src>

<mosaic_0001>
module attributes {stable_mosaic.version = 11 : i64} {
  func.func @_conf_accum_kernel(%arg0: i32, %arg1: i32, %arg2: memref<4x128xf32, #tpu.memory_space<vmem>>, %arg3: memref<1x128xbf16, #tpu.memory_space<vmem>>, %arg4: memref<1x4x4xf32, #tpu.memory_space<vmem>>) attributes {dimension_semantics = [#tpu.dimension_semantics<parallel>, #tpu.dimension_semantics<arbitrary>], iteration_bounds = array<i64: 1, 1>, scalar_prefetch = 0 : i64, scratch_operands = 0 : i64, tpu.core_type = #tpu.core_type<tc>, window_params = [{transform_indices = @transform_0, window_bounds = array<i64: 4, 128>}, {transform_indices = @transform_1, window_bounds = array<i64: 1, 128>}, {transform_indices = @transform_2, window_bounds = array<i64: 1, 4, 4>}]} {
    %c0_i32 = arith.constant 0 : i32
    %0 = arith.cmpi eq, %arg1, %c0_i32 : i32
    %1 = arith.extui %0 : i1 to i32
    %c0_i32_0 = arith.constant 0 : i32
    %2 = arith.cmpi ne, %1, %c0_i32_0 : i32
    scf.if %2 {
      %cst_18 = arith.constant 0.000000e+00 : f32
      %57 = vector.broadcast %cst_18 : f32 to vector<1x4x4xf32>
      %c0_19 = arith.constant 0 : index
      %c0_20 = arith.constant 0 : index
      %c0_21 = arith.constant 0 : index
      %58 = vector.load %arg4[%c0_19, %c0_20, %c0_21] : memref<1x4x4xf32, #tpu.memory_space<vmem>>, vector<1x4x4xf32>
      tpu.vector_store %arg4[%c0_19, %c0_20, %c0_21], %57 {strides = array<i32>} : memref<1x4x4xf32, #tpu.memory_space<vmem>>, vector<1x4x4xf32>,
    } else {
    }
    %c0 = arith.constant 0 : index
    %c0_1 = arith.constant 0 : index
    %3 = vector.load %arg2[%c0, %c0_1] : memref<4x128xf32, #tpu.memory_space<vmem>>, vector<4x128xf32>
    %c0_2 = arith.constant 0 : index
    %c0_3 = arith.constant 0 : index
    %4 = vector.load %arg3[%c0_2, %c0_3] : memref<1x128xbf16, #tpu.memory_space<vmem>>, vector<1x128xbf16>
    %5 = arith.extf %4 : vector<1x128xbf16> to vector<1x128xf32>
    %c1_i32 = arith.constant 1 : i32
    %6 = arith.muli %arg0, %c1_i32 : i32
    %7 = arith.addi %6, %arg1 : i32
    %c128_i32 = arith.constant 128 : i32
    %8 = arith.muli %7, %c128_i32 : i32
    %9 = tpu.iota {dimensions = array<i32: 1>} : vector<1x128xi32>
    %10 = vector.broadcast %8 : i32 to vector<1x128xi32>
    %11 = arith.addi %9, %10 : vector<1x128xi32>
    %c16_i32 = arith.constant 16 : i32
    %12 = vector.broadcast %c16_i32 : i32 to vector<1x128xi32>
    %13 = arith.cmpi slt, %11, %12 : vector<1x128xi32>
    %c0_i32_4 = arith.constant 0 : i32
    %14 = arith.sitofp %c0_i32_4 : i32 to f32
    %15 = vector.shape_cast %13 : vector<1x128xi1> to vector<1x128xi1>
    %16 = vector.broadcast %15 : vector<1x128xi1> to vector<4x128xi1>
    %17 = vector.broadcast %14 : f32 to vector<4x128xf32>
    %18 = arith.select %16, %3, %17 : vector<4x128xi1>, vector<4x128xf32>
    %cst = arith.constant 0.000000e+00 : f32
    %19 = vector.broadcast %cst : f32 to vector<1x128xf32>
    %20 = arith.cmpf oeq, %5, %19 : vector<1x128xf32>
    %21 = arith.extui %20 : vector<1x128xi1> to vector<1x128xi32>
    %22 = arith.sitofp %21 : vector<1x128xi32> to vector<1x128xf32>
    %23 = vector.broadcast %22 : vector<1x128xf32> to vector<4x128xf32>
    %24 = arith.mulf %18, %23 : vector<4x128xf32>
    %cst_5 = arith.constant dense<0.000000e+00> : vector<4xf32>
    %25 = vector.multi_reduction <add>, %24, %cst_5 [1] : vector<4x128xf32> to vector<4xf32>
    %26 = vector.shape_cast %25 : vector<4xf32> to vector<4x1xf32>
    %cst_6 = arith.constant 1.000000e+00 : f32
    %27 = vector.broadcast %cst_6 : f32 to vector<1x128xf32>
    %28 = arith.cmpf oeq, %5, %27 : vector<1x128xf32>
    %29 = arith.extui %28 : vector<1x128xi1> to vector<1x128xi32>
    %30 = arith.sitofp %29 : vector<1x128xi32> to vector<1x128xf32>
    %31 = vector.broadcast %30 : vector<1x128xf32> to vector<4x128xf32>
    %32 = arith.mulf %18, %31 : vector<4x128xf32>
    %cst_7 = arith.constant dense<0.000000e+00> : vector<4xf32>
    %33 = vector.multi_reduction <add>, %32, %cst_7 [1] : vector<4x128xf32> to vector<4xf32>
    %34 = vector.shape_cast %33 : vector<4xf32> to vector<4x1xf32>
    %cst_8 = arith.constant 2.000000e+00 : f32
    %35 = vector.broadcast %cst_8 : f32 to vector<1x128xf32>
    %36 = arith.cmpf oeq, %5, %35 : vector<1x128xf32>
    %37 = arith.extui %36 : vector<1x128xi1> to vector<1x128xi32>
    %38 = arith.sitofp %37 : vector<1x128xi32> to vector<1x128xf32>
    %39 = vector.broadcast %38 : vector<1x128xf32> to vector<4x128xf32>
    %40 = arith.mulf %18, %39 : vector<4x128xf32>
    %cst_9 = arith.constant dense<0.000000e+00> : vector<4xf32>
    %41 = vector.multi_reduction <add>, %40, %cst_9 [1] : vector<4x128xf32> to vector<4xf32>
    %42 = vector.shape_cast %41 : vector<4xf32> to vector<4x1xf32>
    %cst_10 = arith.constant 3.000000e+00 : f32
    %43 = vector.broadcast %cst_10 : f32 to vector<1x128xf32>
    %44 = arith.cmpf oeq, %5, %43 : vector<1x128xf32>
    %45 = arith.extui %44 : vector<1x128xi1> to vector<1x128xi32>
    %46 = arith.sitofp %45 : vector<1x128xi32> to vector<1x128xf32>
    %47 = vector.broadcast %46 : vector<1x128xf32> to vector<4x128xf32>
    %48 = arith.mulf %18, %47 : vector<4x128xf32>
    %cst_11 = arith.constant dense<0.000000e+00> : vector<4xf32>
    %49 = vector.multi_reduction <add>, %48, %cst_11 [1] : vector<4x128xf32> to vector<4xf32>
    %50 = vector.shape_cast %49 : vector<4xf32> to vector<4x1xf32>
    %51 = tpu.concatenate %26, %34, %42, %50 in 1 : vector<4x1xf32>, vector<4x1xf32>, vector<4x1xf32>, vector<4x1xf32> -> vector<4x4xf32>
    %52 = tpu.transpose %51, [1, 0] : vector<4x4xf32> -> vector<4x4xf32>
    %c0_12 = arith.constant 0 : index
    %c0_13 = arith.constant 0 : index
    %c0_14 = arith.constant 0 : index
    %53 = vector.load %arg4[%c0_12, %c0_13, %c0_14] : memref<1x4x4xf32, #tpu.memory_space<vmem>>, vector<1x4x4xf32>
    %54 = vector.shape_cast %52 : vector<4x4xf32> to vector<1x4x4xf32>
    %55 = arith.addf %53, %54 : vector<1x4x4xf32>
    %c0_15 = arith.constant 0 : index
    %c0_16 = arith.constant 0 : index
    %c0_17 = arith.constant 0 : index
    %56 = vector.load %arg4[%c0_15, %c0_16, %c0_17] : memref<1x4x4xf32, #tpu.memory_space<vmem>>, vector<1x4x4xf32>
    tpu.vector_store %arg4[%c0_15, %c0_16, %c0_17], %55 {strides = array<i32>} : memref<1x4x4xf32, #tpu.memory_space<vmem>>, vector<1x4x4xf32>,
    return
  }
  func.func @transform_0(%arg0: i32, %arg1: i32) -> (i32, i32) {
    %c1_i32 = arith.constant 1 : i32
    %0 = arith.muli %arg0, %c1_i32 : i32
    %1 = arith.addi %0, %arg1 : i32
    %c0_i32 = arith.constant 0 : i32
    %c0_i32_0 = arith.constant 0 : i32
    return %c0_i32, %1 : i32, i32
  }
  func.func @transform_1(%arg0: i32, %arg1: i32) -> (i32, i32) {
    %c1_i32 = arith.constant 1 : i32
    %0 = arith.muli %arg0, %c1_i32 : i32
    %1 = arith.addi %0, %arg1 : i32
    %c0_i32 = arith.constant 0 : i32
    %c0_i32_0 = arith.constant 0 : i32
    return %c0_i32, %1 : i32, i32
  }
  func.func @transform_2(%arg0: i32, %arg1: i32) -> (i32, i32, i32) {
    %c0_i32 = arith.constant 0 : i32
    %c0_i32_0 = arith.constant 0 : i32
    %c0_i32_1 = arith.constant 0 : i32
    return %arg0, %c0_i32, %c0_i32_0 : i32, i32, i32
  }
}

</mosaic_0001>

<llo_original>
// kernel: tpu_custom_call.1
$region0: #{tpu_custom_call.1}
  #allocation0 [shape = 'u32[]', space=smem, size = 0x4, offset = 0x4, fixed_abs, tag = 'smem constant byte address 0x4 - core index']
  #allocation1 [shape = 'u32[144,128]{1,0:T(1,128)}', space=vmem, size = 0x12000, scoped, tag = 'internal scratch']
  %s0 = inlined_call_operand.hbm [shape: f32[4,16], index: 0, kind: input, shape index: {}]
  %s1 = inlined_call_operand.vmem [shape: bf16[1,16], index: 1, kind: input, shape index: {}]
  %s2 = inlined_call_operand.hbm [shape: f32[1,4,4], index: 2, kind: output, shape index: {}]
  %s3 = sld [smem:[#allocation0]]
  $region26: #{tpu_custom_call.1} parent=0
    _
  %s5 = ssub.s32 1, %s3
  %s6 = scalar_select 0, %s5, %s3
  $region1: #{tpu_custom_call.1} parent=0
    #allocation2 [shape = 'u8[2048]{0}', space=vmem, size = 0x800, scoped, tag = 'input window, operand 0, single buffered']
    #allocation3 [shape = 's32[1]{0}', space=sflag, size = 0x4, scoped, tag = 'scoped memory for tpu_custom_call.1']
    #allocation4 [shape = 's32[1]{0}', space=sflag, size = 0x4, scoped, tag = 'scoped memory for tpu_custom_call.1']
    #allocation5 [shape = 'u8[2048]{0}', space=vmem, size = 0x800, scoped, tag = 'output window, operand 0, single buffered']
    %7 = vsyncpa [#allocation3], 0
    %8 = vsyncpa [#allocation4], 0
    // Predicated region
    $region2: #{tpu_custom_call.1} parent=1 // pred_check
      _
    $region3: #{tpu_custom_call.1} parent=1 // pred_check_branch
      %10 = sbr.rel (0) target = $region5
    $region4: #{tpu_custom_call.1} parent=1 // pred_region
      %s11 = sadd.s32 0, 0
      %s13 = ssub.s32 64, 64
      %14 = vsyncadd [#allocation3], %s13
      %s15 = smul.addr %s11, 64
      %s16 = scalar_lea.hbm %s0, %s15
      %s18 = sshll.u32 [#allocation2], 4
      %s19 = int_to_ptr.vmem [resolvable:$true] %s18
      %21 = dma.hbm_to_vmem [thread:$0]  %s16, 64, %s19, [#allocation3]
    $region5: #{tpu_custom_call.1} parent=1 // pred_fallthru
      _
    // Predicated region
    $region6: #{tpu_custom_call.1} parent=1 // pred_check
      _
    $region7: #{tpu_custom_call.1} parent=1 // pred_check_branch
      %23 = sbr.rel (0) target = $region9
    $region8: #{tpu_custom_call.1} parent=1 // pred_region
      %s24 = sadd.s32 0, 0
      %p25 = scmp.lt.s32.totalorder %s24, 0
      %s26 = scalar_select %p25, %s24, 0
      %s27 = scalar_lea.vmem %s1, %s26
      %s28 = sadd.s32 0, 0
    $region9: #{tpu_custom_call.1} parent=1 // pred_fallthru
      _
    // Predicated region
    $region10: #{tpu_custom_call.1} parent=1 // pred_check
      _
    $region11: #{tpu_custom_call.1} parent=1 // pred_check_branch
      %30 = sbr.rel (0) target = $region13
    $region12: #{tpu_custom_call.1} parent=1 // pred_region
      %31 = dma.done [#allocation3], 64
    $region13: #{tpu_custom_call.1} parent=1 // pred_fallthru
      _
    %s32 = sadd.s32 0, 0
    %p33 = scmp.lt.s32.totalorder %s32, 0
    %s34 = scalar_select %p33, %s32, 0
    %s35 = scalar_lea.vmem %s1, %s34
    %s36 = sadd.s32 0, 0
    %s37 = sadd.s32 0, 0
    %p38 = scmp.lt.s32.totalorder %s37, 0
    %s39 = scalar_select %p38, %s37, 0
    %s40 = scalar_lea.vmem %s1, %s39
    %s41 = sadd.s32 0, 0
    %p42 = scmp.eq.s32.totalorder 0, 0
    // Predicated region
    $region14: #{tpu_custom_call.1} parent=1 // pred_check
      %p43 = pneg %p42
    $region15: #{tpu_custom_call.1} parent=1 // pred_check_branch
      %45 = sbr.rel (%p43) target = $region17
    $region16: #{tpu_custom_call.1} parent=1 // pred_region
      %vm46 = vcmask 27648
      %47 = vst.msk [vmem:[#allocation5] sm:$0xf] %vm46, 0.0
    $region17: #{tpu_custom_call.1} parent=1 // pred_fallthru
      _
    %v48 = vld [vmem:[#allocation2] sm:$0xf]
    %v49 = vld [vmem:[%s40] sm:$0x1]
    %v50 = vunpack.c.l.bf16 %v49
    %s51 = sadd.s32 0, 0
    %s52 = smul.u32 %s51, 128
    %v53 = vlaneseq
    %v54 = vand.u32 %v53, 127
    %v55 = vstv %s52
    %v56 = vadd.s32 %v54, %v55
    %vm57 = vcmp.lt.s32.totalorder %v56, 16
    %v58 = vsel %vm57, 1, 0
    %vm59 = vcmp.eq.s32.totalorder %v58, 1
    %v60 = vsel %vm59, %v48, 0.0
    %vm61 = vcmp.eq.f32.partialorder %v50, 0.0
    %v62 = vsel %vm61, 1, 0
    %v63 = vcvt.s32.f32 %v62
    %v64 = vlaneseq
    %v65 = vshrl.u32 %v64, 7
    %v66 = vsub.s32 0, %v65
    %v67 = vrot.slane %v63, %v66
    %v68 = vmul.f32 %v60, %v67
    %vm69 = vcmask 1043456
    %v70 = vsel %vm69, %v68, 0.0
    %71 = vadd.xlane.f32.xlu0 %v70
    %v72 = vpop.xlane.xlu0 %71
    %vm73 = vcmp.eq.f32.partialorder %v50, 1.0
    %v74 = vsel %vm73, 1, 0
    %v75 = vcvt.s32.f32 %v74
    %v76 = vlaneseq
    %v77 = vshrl.u32 %v76, 7
    %v78 = vsub.s32 0, %v77
    %v79 = vrot.slane %v75, %v78
    %v80 = vmul.f32 %v60, %v79
    %v81 = vsel %vm69, %v80, 0.0
    %82 = vadd.xlane.f32.xlu0 %v81
    %v83 = vpop.xlane.xlu0 %82
    %vm84 = vcmp.eq.f32.partialorder %v50, 2.0
    %v85 = vsel %vm84, 1, 0
    %v86 = vcvt.s32.f32 %v85
    %v87 = vlaneseq
    %v88 = vshrl.u32 %v87, 7
    %v89 = vsub.s32 0, %v88
    %v90 = vrot.slane %v86, %v89
    %v91 = vmul.f32 %v60, %v90
    %v92 = vsel %vm69, %v91, 0.0
    %93 = vadd.xlane.f32.xlu0 %v92
    %v94 = vpop.xlane.xlu0 %93
    %vm95 = vcmp.eq.f32.partialorder %v50, 3.0
    %v96 = vsel %vm95, 1, 0
    %v97 = vcvt.s32.f32 %v96
    %v98 = vlaneseq
    %v99 = vshrl.u32 %v98, 7
    %v100 = vsub.s32 0, %v99
    %v101 = vrot.slane %v97, %v100
    %v102 = vmul.f32 %v60, %v101
    %v103 = vsel %vm69, %v102, 0.0
    %104 = vadd.xlane.f32.xlu0 %v103
    %v105 = vpop.xlane.xlu0 %104
    %vm106 = vcmask 7168
    %v107 = vsel %vm106, %v72, %v83
    %vm108 = vcmask 15360
    %v109 = vsel %vm108, %v107, %v94
    %vm110 = vcmask 23552
    %v111 = vsel %vm110, %v109, %v105
    %112 = vxpose.xlu0.b32.start [1/16] %v111, 128
    %113 = vxpose.xlu0.b32.cont [2/16] 0.0, 128
    %114 = vxpose.xlu0.b32.cont [3/16] 0.0, 128
    %115 = vxpose.xlu0.b32.cont [4/16] 0.0, 128
    %116 = vxpose.xlu0.b32.cont [5/16] 0.0, 128
    %117 = vxpose.xlu0.b32.cont [6/16] 0.0, 128
    %118 = vxpose.xlu0.b32.cont [7/16] 0.0, 128
    %119 = vxpose.xlu0.b32.cont [8/16] 0.0, 128
    %120 = vxpose.xlu0.b32.cont [9/16] 0.0, 128
    %121 = vxpose.xlu0.b32.cont [10/16] 0.0, 128
    %122 = vxpose.xlu0.b32.cont [11/16] 0.0, 128
    %123 = vxpose.xlu0.b32.cont [12/16] 0.0, 128
    %124 = vxpose.xlu0.b32.cont [13/16] 0.0, 128
    %125 = vxpose.xlu0.b32.cont [14/16] 0.0, 128
    %126 = vxpose.xlu0.b32.cont [15/16] 0.0, 128
    %127 = vxpose.xlu0.b32.end [16/16] 0.0, 128
    %v128 = vpop.trf.xlu0
    %v129 = vpop.trf.xlu0
    %v130 = vpop.trf.xlu0
    %v131 = vpop.trf.xlu0
    %v132 = vpop.trf.xlu0
    %v133 = vpop.trf.xlu0
    %v134 = vpop.trf.xlu0
    %v135 = vpop.trf.xlu0
    %v136 = vpop.trf.xlu0
    %v137 = vpop.trf.xlu0
    %v138 = vpop.trf.xlu0
    %v139 = vpop.trf.xlu0
    %v140 = vpop.trf.xlu0
    %v141 = vpop.trf.xlu0
    %v142 = vpop.trf.xlu0
    %v143 = vpop.trf.xlu0
    %v144 = vld [vmem:[#allocation5] sm:$0xf]
    %v145 = vadd.f32 %v144, %v128
    %vm146 = vcmask 27648
    %147 = vst.msk [vmem:[#allocation5] sm:$0xf] %vm146, %v145
    // Predicated region
    $region18: #{tpu_custom_call.1} parent=1 // pred_check
      _
    $region19: #{tpu_custom_call.1} parent=1 // pred_check_branch
      %149 = sbr.rel (0) target = $region21
    $region20: #{tpu_custom_call.1} parent=1 // pred_region
      %s151 = ssub.s32 64, 64
      %152 = vsyncadd [#allocation4], %s151
      %s154 = sshll.u32 [#allocation5], 4
      %s155 = int_to_ptr.vmem [resolvable:$true] %s154
      %157 = dma.vmem_to_hbm [thread:$0]  %s155, 64, %s2, [#allocation4]
    $region21: #{tpu_custom_call.1} parent=1 // pred_fallthru
      _
    // Predicated region
    $region22: #{tpu_custom_call.1} parent=1 // pred_check
      _
    $region23: #{tpu_custom_call.1} parent=1 // pred_check_branch
      %159 = sbr.rel (0) target = $region25
    $region24: #{tpu_custom_call.1} parent=1 // pred_region
      %160 = dma.done [#allocation4], 64
    $region25: #{tpu_custom_call.1} parent=1 // pred_fallthru
      _
    %161 = vsyncpa [#allocation3], 1
    %162 = vsyncpa [#allocation4], 1

</llo_original>
